<compile_context>
chip_gen: v7x
topology: tpu7x:2x2x1
jax: 0.10.0
libtpu: 0.0.40
codegen_flags: <defaults>
</compile_context>

<pallas_src>
import functools
import math

import jax
import jax.numpy as jnp
from jax import lax
from jax.experimental import pallas as pl
from jax.experimental.pallas import tpu as pltpu


_LANES = 512            # lane-dense last dim (4 x 128) -> unmasked vector stores
_MAX_BLOCK_ROWS = 1024  # 1024 * 512 * 4 B = 2 MiB per f32 buffer
_MIN_GRID = 4           # aim for >= 4 grid steps (v7x dual-TC sharding + pipelining)


def _round_up(a, b):
    return ((a + b - 1) // b) * b


def _gaussian_noise_kernel(seed_ref, x_ref, o_ref, *, scale):
    """o = x + scale * erf_inv(u),  u ~ Uniform(-1, 1),  scale = std * sqrt(2)."""
    block_rows, cols = x_ref.shape

    # Global flat element index of every lane in this block.
    r = lax.broadcasted_iota(jnp.int32, (block_rows, cols), 0)
    c = lax.broadcasted_iota(jnp.int32, (block_rows, cols), 1)
    idx = (pl.program_id(0) * block_rows + r) * cols + c

    # Counter-based hash PRNG (lowbias32 finalizer): bits depend only on
    # (seed, flat index), so noise is identical for any block/grid tuning.
    h = lax.bitcast_convert_type(idx ^ seed_ref[0], jnp.uint32)
    h = h ^ (h >> 16)
    h = h * jnp.uint32(0x7FEB352D)
    h = h ^ (h >> 15)
    h = h * jnp.uint32(0x846CA68B)
    h = h ^ (h >> 16)

    # Mantissa bit-trick uniform: exponent of 1.0 OR'd in and lowest mantissa bit
    # forced -> f in [1 + 2^-23, 2), so v = 2f - 3 is strictly inside (-1, 1) and
    # erf_inv stays finite.  No int->float convert needed.
    f = lax.bitcast_convert_type((h >> 9) | jnp.uint32(0x3F800001), jnp.float32)
    z = lax.erf_inv(f * 2.0 - 3.0)          # ~N(0, 1/2); the sqrt(2) is folded into scale

    o_ref[...] = (x_ref[...].astype(jnp.float32) + scale * z).astype(o_ref.dtype)


def gaussian_noise(x, seed, *, std=0.01, training=True):
    """JAX/Pallas equivalent of GaussianNoise.forward for any input shape."""
    if (not training) or std == 0.0:
        return x

    orig_shape = x.shape
    n = math.prod(orig_shape)
    cols = _LANES
    rows = pl.cdiv(n, cols)
    pad = rows * cols - n

    flat = x.reshape(-1)
    if pad:
        # TODO(synk): awkward (n % 512 != 0) sizes still pay one small staging copy;
        # the common activation sizes hit the pad == 0 fast path (free reshape).
        flat = jnp.pad(flat, (0, pad))
    x2d = flat.reshape(rows, cols)

    if rows <= 8:
        block_rows = rows                                   # full-extent single block
    else:
        block_rows = min(_MAX_BLOCK_ROWS,
                         _round_up(pl.cdiv(rows, _MIN_GRID), 8))
    grid = pl.cdiv(rows, block_rows)

    seed_arr = jnp.asarray(seed, jnp.int32).reshape((1,))
    scale = float(std) * math.sqrt(2.0)

    out2d = pl.pallas_call(
        functools.partial(_gaussian_noise_kernel, scale=scale),
        out_shape=jax.ShapeDtypeStruct((rows, cols), x.dtype),
        grid_spec=pltpu.PrefetchScalarGridSpec(
            num_scalar_prefetch=1,
            grid=(grid,),
            in_specs=[pl.BlockSpec((block_rows, cols), lambda i, s: (i, 0))],
            out_specs=pl.BlockSpec((block_rows, cols), lambda i, s: (i, 0)),
        ),
        compiler_params=pltpu.CompilerParams(
            dimension_semantics=("parallel",)),
    )(seed_arr, x2d)

    out = out2d.reshape(-1)
    if pad:
        out = out[:n]
    return out.reshape(orig_shape)


if __name__ == "__main__":
    # Shapes consistent with the VAE_BILSTM_MHA usage: x is (batch, seq, leads).
    BATCH, SEQ_LEN, N_LEADS = 2, 8, 4
    root = jax.random.PRNGKey(0)
    kx, kl = jax.random.split(root)

    x = jax.random.normal(kx, (BATCH, SEQ_LEN, N_LEADS), jnp.float32)
    noisy_fn = jax.jit(functools.partial(gaussian_noise, std=0.01, training=True))

    # --- training mode: noise applied, deterministic per seed ---
    y = jax.block_until_ready(noisy_fn(x, 1234))
    assert y.shape == x.shape and y.dtype == x.dtype
    assert bool(jnp.all(jnp.isfinite(y)))
    assert not bool(jnp.allclose(y, x))                 # noise actually applied
    y2 = jax.block_until_ready(noisy_fn(x, 1234))
    assert bool(jnp.array_equal(y, y2))                 # same seed -> same noise
    y3 = jax.block_until_ready(noisy_fn(x, 4321))
    assert not bool(jnp.array_equal(y, y3))             # different seed -> different noise

    # --- eval mode: identity ---
    y_eval = gaussian_noise(x, 1234, std=0.01, training=False)
    assert bool(jnp.array_equal(y_eval, x))

    # --- native-dtype path: bf16 in -> bf16 out, no wrapper-side casts ---
    xb = x.astype(jnp.bfloat16)
    yb = jax.block_until_ready(gaussian_noise(xb, 7, std=0.05, training=True))
    assert yb.dtype == jnp.bfloat16 and yb.shape == xb.shape
    assert bool(jnp.all(jnp.isfinite(yb.astype(jnp.float32))))
    assert not bool(jnp.array_equal(yb, xb))

    # --- larger tensor: pad-free reshape path, multi-step "parallel" grid,
    #     and noise statistics (mean ~ 0, std ~ 0.01). ---
    xl = jax.random.normal(kl, (16, 512, 32), jnp.float32)   # 262144 elems -> rows=512, grid=4
    yl = jax.block_until_ready(noisy_fn(xl, 7))
    noise = (yl - xl).reshape(-1)
    assert bool(jnp.all(jnp.isfinite(noise)))
    assert abs(float(jnp.mean(noise))) < 3e-4
    assert abs(float(jnp.std(noise)) - 0.01) < 5e-4
    half = noise.shape[0] // 2
    assert not bool(jnp.allclose(noise[:half], noise[half:]))  # distinct per-element streams

    print("KERNEL_OK")
</pallas_src>

<mosaic_0001>
module attributes {stable_mosaic.version = 11 : i64} {
  func.func @_gaussian_noise_kernel(%arg0: i32, %arg1: memref<1xi32, #tpu.memory_space<smem>>, %arg2: memref<1x512xf32, #tpu.memory_space<vmem>>, %arg3: memref<1x512xf32, #tpu.memory_space<vmem>>) attributes {dimension_semantics = [#tpu.dimension_semantics<parallel>], iteration_bounds = array<i64: 1>, scalar_prefetch = 1 : i64, scratch_operands = 0 : i64, tpu.core_type = #tpu.core_type<tc>, window_params = [{transform_indices = @transform_0, window_bounds = array<i64: 1, 512>}, {transform_indices = @transform_1, window_bounds = array<i64: 1, 512>}]} {
    %0 = tpu.iota {dimensions = array<i32: 0>} : vector<1x512xi32>
    %1 = tpu.iota {dimensions = array<i32: 1>} : vector<1x512xi32>
    %c1_i32 = arith.constant 1 : i32
    %2 = arith.muli %arg0, %c1_i32 : i32
    %3 = vector.broadcast %2 : i32 to vector<1x512xi32>
    %4 = arith.addi %3, %0 : vector<1x512xi32>
    %c512_i32 = arith.constant 512 : i32
    %5 = vector.broadcast %c512_i32 : i32 to vector<1x512xi32>
    %6 = arith.muli %4, %5 : vector<1x512xi32>
    %7 = arith.addi %6, %1 : vector<1x512xi32>
    %c0 = arith.constant 0 : index
    %8 = memref.load %arg1[%c0] : memref<1xi32, #tpu.memory_space<smem>>
    %9 = vector.broadcast %8 : i32 to vector<1x512xi32>
    %10 = arith.xori %7, %9 : vector<1x512xi32>
    %11 = tpu.bitcast %10 : vector<1x512xi32> -> vector<1x512xi32>
    %c16_i32 = arith.constant 16 : i32
    %12 = vector.broadcast %c16_i32 : i32 to vector<1x512xi32>
    %13 = arith.shrui %11, %12 : vector<1x512xi32>
    %14 = arith.xori %11, %13 : vector<1x512xi32>
    %c2146121005_i32 = arith.constant 2146121005 : i32
    %15 = vector.broadcast %c2146121005_i32 : i32 to vector<1x512xi32>
    %16 = arith.muli %14, %15 : vector<1x512xi32>
    %c15_i32 = arith.constant 15 : i32
    %17 = vector.broadcast %c15_i32 : i32 to vector<1x512xi32>
    %18 = arith.shrui %16, %17 : vector<1x512xi32>
    %19 = arith.xori %16, %18 : vector<1x512xi32>
    %c-2073254261_i32 = arith.constant -2073254261 : i32
    %20 = vector.broadcast %c-2073254261_i32 : i32 to vector<1x512xi32>
    %21 = arith.muli %19, %20 : vector<1x512xi32>
    %c16_i32_0 = arith.constant 16 : i32
    %22 = vector.broadcast %c16_i32_0 : i32 to vector<1x512xi32>
    %23 = arith.shrui %21, %22 : vector<1x512xi32>
    %24 = arith.xori %21, %23 : vector<1x512xi32>
    %c9_i32 = arith.constant 9 : i32
    %25 = vector.broadcast %c9_i32 : i32 to vector<1x512xi32>
    %26 = arith.shrui %24, %25 : vector<1x512xi32>
    %c1065353217_i32 = arith.constant 1065353217 : i32
    %27 = vector.broadcast %c1065353217_i32 : i32 to vector<1x512xi32>
    %28 = arith.ori %26, %27 : vector<1x512xi32>
    %29 = tpu.bitcast %28 : vector<1x512xi32> -> vector<1x512xf32>
    %cst = arith.constant 2.000000e+00 : f32
    %30 = vector.broadcast %cst : f32 to vector<1x512xf32>
    %31 = arith.mulf %29, %30 : vector<1x512xf32>
    %cst_1 = arith.constant 3.000000e+00 : f32
    %32 = vector.broadcast %cst_1 : f32 to vector<1x512xf32>
    %33 = arith.subf %31, %32 : vector<1x512xf32>
    %cst_2 = arith.constant 0.000000e+00 : f32
    %34 = vector.broadcast %cst_2 : f32 to vector<1x512xf32>
    %35 = arith.subf %34, %33 : vector<1x512xf32>
    %36 = arith.mulf %33, %35 : vector<1x512xf32>
    %37 = math.log1p %36 : vector<1x512xf32>
    %cst_3 = arith.constant 0.000000e+00 : f32
    %38 = vector.broadcast %cst_3 : f32 to vector<1x512xf32>
    %39 = arith.subf %38, %37 : vector<1x512xf32>
    %cst_4 = arith.constant 5.000000e+00 : f32
    %40 = vector.broadcast %cst_4 : f32 to vector<1x512xf32>
    %41 = arith.cmpf olt, %39, %40 : vector<1x512xf32>
    %cst_5 = arith.constant 2.500000e+00 : f32
    %42 = vector.broadcast %cst_5 : f32 to vector<1x512xf32>
    %43 = arith.subf %39, %42 : vector<1x512xf32>
    %44 = math.sqrt %39 : vector<1x512xf32>
    %cst_6 = arith.constant 3.000000e+00 : f32
    %45 = vector.broadcast %cst_6 : f32 to vector<1x512xf32>
    %46 = arith.subf %44, %45 : vector<1x512xf32>
    %47 = arith.select %41, %43, %46 : vector<1x512xi1>, vector<1x512xf32>
    %cst_7 = arith.constant 2.81022636E-8 : f32
    %cst_8 = arith.constant -2.00214257E-4 : f32
    %48 = vector.broadcast %cst_7 : f32 to vector<1x512xf32>
    %49 = vector.broadcast %cst_8 : f32 to vector<1x512xf32>
    %50 = arith.select %41, %48, %49 : vector<1x512xi1>, vector<1x512xf32>
    %cst_9 = arith.constant 3.43273939E-7 : f32
    %cst_10 = arith.constant 1.00950558E-4 : f32
    %51 = vector.broadcast %cst_9 : f32 to vector<1x512xf32>
    %52 = vector.broadcast %cst_10 : f32 to vector<1x512xf32>
    %53 = arith.select %41, %51, %52 : vector<1x512xi1>, vector<1x512xf32>
    %54 = arith.mulf %50, %47 : vector<1x512xf32>
    %55 = arith.addf %53, %54 : vector<1x512xf32>
    %cst_11 = arith.constant -3.5233877E-6 : f32
    %cst_12 = arith.constant 0.00134934322 : f32
    %56 = vector.broadcast %cst_11 : f32 to vector<1x512xf32>
    %57 = vector.broadcast %cst_12 : f32 to vector<1x512xf32>
    %58 = arith.select %41, %56, %57 : vector<1x512xi1>, vector<1x512xf32>
    %59 = arith.mulf %55, %47 : vector<1x512xf32>
    %60 = arith.addf %58, %59 : vector<1x512xf32>
    %cst_13 = arith.constant -4.39150654E-6 : f32
    %cst_14 = arith.constant -0.00367342844 : f32
    %61 = vector.broadcast %cst_13 : f32 to vector<1x512xf32>
    %62 = vector.broadcast %cst_14 : f32 to vector<1x512xf32>
    %63 = arith.select %41, %61, %62 : vector<1x512xi1>, vector<1x512xf32>
    %64 = arith.mulf %60, %47 : vector<1x512xf32>
    %65 = arith.addf %63, %64 : vector<1x512xf32>
    %cst_15 = arith.constant 2.1858087E-4 : f32
    %cst_16 = arith.constant 0.00573950773 : f32
    %66 = vector.broadcast %cst_15 : f32 to vector<1x512xf32>
    %67 = vector.broadcast %cst_16 : f32 to vector<1x512xf32>
    %68 = arith.select %41, %66, %67 : vector<1x512xi1>, vector<1x512xf32>
    %69 = arith.mulf %65, %47 : vector<1x512xf32>
    %70 = arith.addf %68, %69 : vector<1x512xf32>
    %cst_17 = arith.constant -0.00125372503 : f32
    %cst_18 = arith.constant -0.0076224613 : f32
    %71 = vector.broadcast %cst_17 : f32 to vector<1x512xf32>
    %72 = vector.broadcast %cst_18 : f32 to vector<1x512xf32>
    %73 = arith.select %41, %71, %72 : vector<1x512xi1>, vector<1x512xf32>
    %74 = arith.mulf %70, %47 : vector<1x512xf32>
    %75 = arith.addf %73, %74 : vector<1x512xf32>
    %cst_19 = arith.constant -0.00417768164 : f32
    %cst_20 = arith.constant 0.00943887047 : f32
    %76 = vector.broadcast %cst_19 : f32 to vector<1x512xf32>
    %77 = vector.broadcast %cst_20 : f32 to vector<1x512xf32>
    %78 = arith.select %41, %76, %77 : vector<1x512xi1>, vector<1x512xf32>
    %79 = arith.mulf %75, %47 : vector<1x512xf32>
    %80 = arith.addf %78, %79 : vector<1x512xf32>
    %cst_21 = arith.constant 0.246640727 : f32
    %cst_22 = arith.constant 1.00167406 : f32
    %81 = vector.broadcast %cst_21 : f32 to vector<1x512xf32>
    %82 = vector.broadcast %cst_22 : f32 to vector<1x512xf32>
    %83 = arith.select %41, %81, %82 : vector<1x512xi1>, vector<1x512xf32>
    %84 = arith.mulf %80, %47 : vector<1x512xf32>
    %85 = arith.addf %83, %84 : vector<1x512xf32>
    %cst_23 = arith.constant 1.50140941 : f32
    %cst_24 = arith.constant 2.83297682 : f32
    %86 = vector.broadcast %cst_23 : f32 to vector<1x512xf32>
    %87 = vector.broadcast %cst_24 : f32 to vector<1x512xf32>
    %88 = arith.select %41, %86, %87 : vector<1x512xi1>, vector<1x512xf32>
    %89 = arith.mulf %85, %47 : vector<1x512xf32>
    %90 = arith.addf %88, %89 : vector<1x512xf32>
    %91 = math.absf %33 : vector<1x512xf32>
    %cst_25 = arith.constant 1.000000e+00 : f32
    %92 = vector.broadcast %cst_25 : f32 to vector<1x512xf32>
    %93 = arith.cmpf oeq, %91, %92 : vector<1x512xf32>
    %cst_26 = arith.constant 0x7F800000 : f32
    %94 = vector.broadcast %cst_26 : f32 to vector<1x512xf32>
    %95 = arith.mulf %94, %33 : vector<1x512xf32>
    %96 = arith.mulf %90, %33 : vector<1x512xf32>
    %97 = arith.select %93, %95, %96 : vector<1x512xi1>, vector<1x512xf32>
    %c0_27 = arith.constant 0 : index
    %c0_28 = arith.constant 0 : index
    %98 = vector.load %arg2[%c0_27, %c0_28] : memref<1x512xf32, #tpu.memory_space<vmem>>, vector<1x512xf32>
    %cst_29 = arith.constant 0.0141421352 : f32
    %99 = vector.broadcast %cst_29 : f32 to vector<1x512xf32>
    %100 = arith.mulf %99, %97 : vector<1x512xf32>
    %101 = arith.addf %98, %100 : vector<1x512xf32>
    %c0_30 = arith.constant 0 : index
    %c0_31 = arith.constant 0 : index
    %102 = vector.load %arg3[%c0_30, %c0_31] : memref<1x512xf32, #tpu.memory_space<vmem>>, vector<1x512xf32>
    tpu.vector_store %arg3[%c0_30, %c0_31], %101 {strides = array<i32>} : memref<1x512xf32, #tpu.memory_space<vmem>>, vector<1x512xf32>,
    return
  }
  func.func @transform_0(%arg0: i32, %arg1: memref<1xi32, #tpu.memory_space<smem>>) -> (i32, i32) {
    %c0_i32 = arith.constant 0 : i32
    %c0_i32_0 = arith.constant 0 : i32
    return %arg0, %c0_i32 : i32, i32
  }
  func.func @transform_1(%arg0: i32, %arg1: memref<1xi32, #tpu.memory_space<smem>>) -> (i32, i32) {
    %c0_i32 = arith.constant 0 : i32
    %c0_i32_0 = arith.constant 0 : i32
    return %arg0, %c0_i32 : i32, i32
  }
}

</mosaic_0001>

<llo_original>
// kernel: gaussian_noise.1
$region0: #{gaussian_noise.1}
  #allocation0 [shape = 'u32[]', space=smem, size = 0x4, offset = 0x4, fixed_abs, tag = 'smem constant byte address 0x4 - core index']
  #allocation1 [shape = 'u32[144,128]{1,0:T(1,128)}', space=vmem, size = 0x12000, scoped, tag = 'internal scratch']
  #allocation2 [shape = 's32[1]{0}', space=sflag, size = 0x4, scoped, tag = 'scoped memory for gaussian_noise.1']
  #allocation3 [shape = 's32[1]{0:T(128)S(6)}', space=smem, size = 0x200, scoped, tag = 'prefetched SMEM operand 0']
  %s0 = inlined_call_operand.<no memory space> [shape: s32[1], index: 0, kind: input, shape index: {}]
  %s1 = inlined_call_operand.vmem [shape: f32[1,512], index: 1, kind: input, shape index: {}]
  %s2 = inlined_call_operand.vmem [shape: f32[1,512], index: 2, kind: output, shape index: {}]
  %s3 = sld [smem:[#allocation0]]
  $region14: #{gaussian_noise.1} parent=0
    _
  %s5 = ssub.s32 1, %s3
  %s6 = scalar_select 0, %s5, %s3
  %7 = sst [smem:[#allocation3]] %s0
  // Predicated region
  $region2: #{gaussian_noise.1} parent=0 // pred_check
    _
  $region3: #{gaussian_noise.1} parent=0 // pred_check_branch
    %9 = sbr.rel (0) target = $region5
  $region4: #{gaussian_noise.1} parent=0 // pred_region
    _
  $region5: #{gaussian_noise.1} parent=0 // pred_fallthru
    _
  %v10 = vlaneseq
  %v11 = vshrl.u32 %v10, 7
  %v12 = vlaneseq
  %v13 = vand.u32 %v12, 127
  %v14 = vadd.s32 %v13, 128
  %v15 = vadd.s32 %v13, 256
  %v16 = vadd.s32 %v13, 384
  %v17 = vstv 0
  %v18 = vadd.s32 %v17, %v11
  %v19 = vmul.u32 %v18, 512
  %v20 = vadd.s32 %v19, %v13
  %v21 = vadd.s32 %v19, %v14
  %v22 = vadd.s32 %v19, %v15
  %v23 = vadd.s32 %v19, %v16
  %s24 = sld [smem:[#allocation3]]
  %v25 = vstv %s24
  %v26 = vxor.u32 %v20, %v25
  %v27 = vxor.u32 %v21, %v25
  %v28 = vxor.u32 %v22, %v25
  %v29 = vxor.u32 %v23, %v25
  %v30 = vshrl.u32 %v26, 16
  %v31 = vshrl.u32 %v27, 16
  %v32 = vshrl.u32 %v28, 16
  %v33 = vshrl.u32 %v29, 16
  %v34 = vxor.u32 %v26, %v30
  %v35 = vxor.u32 %v27, %v31
  %v36 = vxor.u32 %v28, %v32
  %v37 = vxor.u32 %v29, %v33
  %v38 = vmul.u32 %v34, 2146121005
  %v39 = vmul.u32 %v35, 2146121005
  %v40 = vmul.u32 %v36, 2146121005
  %v41 = vmul.u32 %v37, 2146121005
  %v42 = vshrl.u32 %v38, 15
  %v43 = vshrl.u32 %v39, 15
  %v44 = vshrl.u32 %v40, 15
  %v45 = vshrl.u32 %v41, 15
  %v46 = vxor.u32 %v38, %v42
  %v47 = vxor.u32 %v39, %v43
  %v48 = vxor.u32 %v40, %v44
  %v49 = vxor.u32 %v41, %v45
  %v50 = vmul.u32 %v46, 2221713035
  %v51 = vmul.u32 %v47, 2221713035
  %v52 = vmul.u32 %v48, 2221713035
  %v53 = vmul.u32 %v49, 2221713035
  %v54 = vshrl.u32 %v50, 16
  %v55 = vshrl.u32 %v51, 16
  %v56 = vshrl.u32 %v52, 16
  %v57 = vshrl.u32 %v53, 16
  %v58 = vxor.u32 %v50, %v54
  %v59 = vxor.u32 %v51, %v55
  %v60 = vxor.u32 %v52, %v56
  %v61 = vxor.u32 %v53, %v57
  %v62 = vshrl.u32 %v58, 9
  %v63 = vshrl.u32 %v59, 9
  %v64 = vshrl.u32 %v60, 9
  %v65 = vshrl.u32 %v61, 9
  %v66 = vor.u32 %v62, 1065353217
  %v67 = vor.u32 %v63, 1065353217
  %v68 = vor.u32 %v64, 1065353217
  %v69 = vor.u32 %v65, 1065353217
  %v74 = vmul.f32 %v66, 2.0
  %v75 = vmul.f32 %v67, 2.0
  %v76 = vmul.f32 %v68, 2.0
  %v77 = vmul.f32 %v69, 2.0
  %v78 = vsub.f32 %v74, 3.0
  %v79 = vsub.f32 %v75, 3.0
  %v80 = vsub.f32 %v76, 3.0
  %v81 = vsub.f32 %v77, 3.0
  %v82 = vsub.f32 0.0, %v78
  %v83 = vsub.f32 0.0, %v79
  %v84 = vsub.f32 0.0, %v80
  %v85 = vsub.f32 0.0, %v81
  %v86 = vmul.f32 %v78, %v82
  %v87 = vmul.f32 %v79, %v83
  %v88 = vmul.f32 %v80, %v84
  %v89 = vmul.f32 %v81, %v85
  %v90 = vadd.f32 %v86, 1.0
  %v91 = vlog2.pop %v90
  %v92 = vmul.f32 %v91, 0.6931472
  %v93 = vmul.f32 -0.5, %v86
  %v94 = vadd.f32 %v93, 1.0
  %v95 = vmul.f32 %v94, %v86
  %v96 = vand.u32 2147483647, %v86
  %vm97 = vcmp.lt.f32.partialorder %v96, 0.0004427343
  %v98 = vsel %vm97, %v95, %v92
  %v99 = vadd.f32 %v87, 1.0
  %v100 = vlog2.pop %v99
  %v101 = vmul.f32 %v100, 0.6931472
  %v102 = vmul.f32 -0.5, %v87
  %v103 = vadd.f32 %v102, 1.0
  %v104 = vmul.f32 %v103, %v87
  %v105 = vand.u32 2147483647, %v87
  %vm106 = vcmp.lt.f32.partialorder %v105, 0.0004427343
  %v107 = vsel %vm106, %v104, %v101
  %v108 = vadd.f32 %v88, 1.0
  %v109 = vlog2.pop %v108
  %v110 = vmul.f32 %v109, 0.6931472
  %v111 = vmul.f32 -0.5, %v88
  %v112 = vadd.f32 %v111, 1.0
  %v113 = vmul.f32 %v112, %v88
  %v114 = vand.u32 2147483647, %v88
  %vm115 = vcmp.lt.f32.partialorder %v114, 0.0004427343
  %v116 = vsel %vm115, %v113, %v110
  %v117 = vadd.f32 %v89, 1.0
  %v118 = vlog2.pop %v117
  %v119 = vmul.f32 %v118, 0.6931472
  %v120 = vmul.f32 -0.5, %v89
  %v121 = vadd.f32 %v120, 1.0
  %v122 = vmul.f32 %v121, %v89
  %v123 = vand.u32 2147483647, %v89
  %vm124 = vcmp.lt.f32.partialorder %v123, 0.0004427343
  %v125 = vsel %vm124, %v122, %v119
  %v126 = vsub.f32 0.0, %v98
  %v127 = vsub.f32 0.0, %v107
  %v128 = vsub.f32 0.0, %v116
  %v129 = vsub.f32 0.0, %v125
  %vm130 = vcmp.lt.f32.partialorder %v126, 5.0
  %vm131 = vcmp.lt.f32.partialorder %v127, 5.0
  %vm132 = vcmp.lt.f32.partialorder %v128, 5.0
  %vm133 = vcmp.lt.f32.partialorder %v129, 5.0
  %v134 = vsub.f32 %v126, 2.5
  %v135 = vsub.f32 %v127, 2.5
  %v136 = vsub.f32 %v128, 2.5
  %v137 = vsub.f32 %v129, 2.5
  %v138 = vrsqrt.pop %v126
  %v139 = vmul.f32 %v126, %v138
  %vm140 = vcmp.eq.f32.partialorder %v126, inf
  %v141 = vsel %vm140, %v126, %v139
  %vm142 = vcmp.eq.f32.partialorder %v126, 0.0
  %v143 = vand.u32 %v126, 2147483648
  %v144 = vsel %vm142, %v143, %v141
  %v145 = vrsqrt.pop %v127
  %v146 = vmul.f32 %v127, %v145
  %vm147 = vcmp.eq.f32.partialorder %v127, inf
  %v148 = vsel %vm147, %v127, %v146
  %vm149 = vcmp.eq.f32.partialorder %v127, 0.0
  %v150 = vand.u32 %v127, 2147483648
  %v151 = vsel %vm149, %v150, %v148
  %v152 = vrsqrt.pop %v128
  %v153 = vmul.f32 %v128, %v152
  %vm154 = vcmp.eq.f32.partialorder %v128, inf
  %v155 = vsel %vm154, %v128, %v153
  %vm156 = vcmp.eq.f32.partialorder %v128, 0.0
  %v157 = vand.u32 %v128, 2147483648
  %v158 = vsel %vm156, %v157, %v155
  %v159 = vrsqrt.pop %v129
  %v160 = vmul.f32 %v129, %v159
  %vm161 = vcmp.eq.f32.partialorder %v129, inf
  %v162 = vsel %vm161, %v129, %v160
  %vm163 = vcmp.eq.f32.partialorder %v129, 0.0
  %v164 = vand.u32 %v129, 2147483648
  %v165 = vsel %vm163, %v164, %v162
  %v166 = vsub.f32 %v144, 3.0
  %v167 = vsub.f32 %v151, 3.0
  %v168 = vsub.f32 %v158, 3.0
  %v169 = vsub.f32 %v165, 3.0
  %v170 = vsel %vm130, %v134, %v166
  %v171 = vsel %vm131, %v135, %v167
  %v172 = vsel %vm132, %v136, %v168
  %v173 = vsel %vm133, %v137, %v169
  %v174 = vsel %vm130, 2.8102264e-08, -0.00020021426
  %v175 = vsel %vm131, 2.8102264e-08, -0.00020021426
  %v176 = vsel %vm132, 2.8102264e-08, -0.00020021426
  %v177 = vsel %vm133, 2.8102264e-08, -0.00020021426
  %v178 = vsel %vm130, 3.4327394e-07, 0.00010095056
  %v179 = vsel %vm131, 3.4327394e-07, 0.00010095056
  %v180 = vsel %vm132, 3.4327394e-07, 0.00010095056
  %v181 = vsel %vm133, 3.4327394e-07, 0.00010095056
  %v182 = vmul.f32 %v174, %v170
  %v183 = vmul.f32 %v175, %v171
  %v184 = vmul.f32 %v176, %v172
  %v185 = vmul.f32 %v177, %v173
  %v186 = vadd.f32 %v178, %v182
  %v187 = vadd.f32 %v179, %v183
  %v188 = vadd.f32 %v180, %v184
  %v189 = vadd.f32 %v181, %v185
  %v190 = vsel %vm130, -3.5233877e-06, 0.0013493432
  %v191 = vsel %vm131, -3.5233877e-06, 0.0013493432
  %v192 = vsel %vm132, -3.5233877e-06, 0.0013493432
  %v193 = vsel %vm133, -3.5233877e-06, 0.0013493432
  %v194 = vmul.f32 %v186, %v170
  %v195 = vmul.f32 %v187, %v171
  %v196 = vmul.f32 %v188, %v172
  %v197 = vmul.f32 %v189, %v173
  %v198 = vadd.f32 %v190, %v194
  %v199 = vadd.f32 %v191, %v195
  %v200 = vadd.f32 %v192, %v196
  %v201 = vadd.f32 %v193, %v197
  %v202 = vsel %vm130, -4.3915065e-06, -0.0036734284
  %v203 = vsel %vm131, -4.3915065e-06, -0.0036734284
  %v204 = vsel %vm132, -4.3915065e-06, -0.0036734284
  %v205 = vsel %vm133, -4.3915065e-06, -0.0036734284
  %v206 = vmul.f32 %v198, %v170
  %v207 = vmul.f32 %v199, %v171
  %v208 = vmul.f32 %v200, %v172
  %v209 = vmul.f32 %v201, %v173
  %v210 = vadd.f32 %v202, %v206
  %v211 = vadd.f32 %v203, %v207
  %v212 = vadd.f32 %v204, %v208
  %v213 = vadd.f32 %v205, %v209
  %v214 = vsel %vm130, 0.00021858087, 0.0057395077
  %v215 = vsel %vm131, 0.00021858087, 0.0057395077
  %v216 = vsel %vm132, 0.00021858087, 0.0057395077
  %v217 = vsel %vm133, 0.00021858087, 0.0057395077
  %v218 = vmul.f32 %v210, %v170
  %v219 = vmul.f32 %v211, %v171
  %v220 = vmul.f32 %v212, %v172
  %v221 = vmul.f32 %v213, %v173
  %v222 = vadd.f32 %v214, %v218
  %v223 = vadd.f32 %v215, %v219
  %v224 = vadd.f32 %v216, %v220
  %v225 = vadd.f32 %v217, %v221
  %v226 = vsel %vm130, -0.001253725, -0.0076224613
  %v227 = vsel %vm131, -0.001253725, -0.0076224613
  %v228 = vsel %vm132, -0.001253725, -0.0076224613
  %v229 = vsel %vm133, -0.001253725, -0.0076224613
  %v230 = vmul.f32 %v222, %v170
  %v231 = vmul.f32 %v223, %v171
  %v232 = vmul.f32 %v224, %v172
  %v233 = vmul.f32 %v225, %v173
  %v234 = vadd.f32 %v226, %v230
  %v235 = vadd.f32 %v227, %v231
  %v236 = vadd.f32 %v228, %v232
  %v237 = vadd.f32 %v229, %v233
  %v238 = vsel %vm130, -0.0041776816, 0.0094388705
  %v239 = vsel %vm131, -0.0041776816, 0.0094388705
  %v240 = vsel %vm132, -0.0041776816, 0.0094388705
  %v241 = vsel %vm133, -0.0041776816, 0.0094388705
  %v242 = vmul.f32 %v234, %v170
  %v243 = vmul.f32 %v235, %v171
  %v244 = vmul.f32 %v236, %v172
  %v245 = vmul.f32 %v237, %v173
  %v246 = vadd.f32 %v238, %v242
  %v247 = vadd.f32 %v239, %v243
  %v248 = vadd.f32 %v240, %v244
  %v249 = vadd.f32 %v241, %v245
  %v250 = vsel %vm130, 0.24664073, 1.001674
  %v251 = vsel %vm131, 0.24664073, 1.001674
  %v252 = vsel %vm132, 0.24664073, 1.001674
  %v253 = vsel %vm133, 0.24664073, 1.001674
  %v254 = vmul.f32 %v246, %v170
  %v255 = vmul.f32 %v247, %v171
  %v256 = vmul.f32 %v248, %v172
  %v257 = vmul.f32 %v249, %v173
  %v258 = vadd.f32 %v250, %v254
  %v259 = vadd.f32 %v251, %v255
  %v260 = vadd.f32 %v252, %v256
  %v261 = vadd.f32 %v253, %v257
  %v262 = vsel %vm130, 1.5014094, 2.8329768
  %v263 = vsel %vm131, 1.5014094, 2.8329768
  %v264 = vsel %vm132, 1.5014094, 2.8329768
  %v265 = vsel %vm133, 1.5014094, 2.8329768
  %v266 = vmul.f32 %v258, %v170
  %v267 = vmul.f32 %v259, %v171
  %v268 = vmul.f32 %v260, %v172
  %v269 = vmul.f32 %v261, %v173
  %v270 = vadd.f32 %v262, %v266
  %v271 = vadd.f32 %v263, %v267
  %v272 = vadd.f32 %v264, %v268
  %v273 = vadd.f32 %v265, %v269
  %v274 = vand.u32 2147483647, %v78
  %v275 = vand.u32 2147483647, %v79
  %v276 = vand.u32 2147483647, %v80
  %v277 = vand.u32 2147483647, %v81
  %vm278 = vcmp.eq.f32.partialorder %v274, 1.0
  %vm279 = vcmp.eq.f32.partialorder %v275, 1.0
  %vm280 = vcmp.eq.f32.partialorder %v276, 1.0
  %vm281 = vcmp.eq.f32.partialorder %v277, 1.0
  %v282 = vmul.f32 %v78, inf
  %v283 = vmul.f32 %v79, inf
  %v284 = vmul.f32 %v80, inf
  %v285 = vmul.f32 %v81, inf
  %v286 = vmul.f32 %v270, %v78
  %v287 = vmul.f32 %v271, %v79
  %v288 = vmul.f32 %v272, %v80
  %v289 = vmul.f32 %v273, %v81
  %v290 = vsel %vm278, %v282, %v286
  %v291 = vsel %vm279, %v283, %v287
  %v292 = vsel %vm280, %v284, %v288
  %v293 = vsel %vm281, %v285, %v289
  %v294 = vld [vmem:[%s1] sm:$0xf]
  %v295 = vmul.f32 %v290, 0.014142135
  %v296 = vmul.f32 %v291, 0.014142135
  %v297 = vmul.f32 %v292, 0.014142135
  %v298 = vmul.f32 %v293, 0.014142135
  %v303 = vcombine.low %v295, %v296
  %v304 = vcombine.low %v297, %v298
  %v306 = vunpack.c.l.s4 1966171168
  %v307 = vunpack.c.0.s8 %v306
  %v308 = vlaneseq
  %v309 = vshrl.u32 %v308, 7
  %v310 = vsub.s32 %v307, %v309
  %v311 = vrot.slane %v303, %v310
  %v313 = vunpack.c.l.s4 1966171168
  %v314 = vunpack.c.0.s8 %v313
  %v315 = vlaneseq
  %v316 = vshrl.u32 %v315, 7
  %v317 = vsub.s32 %v314, %v316
  %v318 = vrot.slane %v304, %v317
  %v319 = vcombine.low %v311, %v318
  %v321 = vunpack.c.l.s4 1966171168
  %v322 = vunpack.c.0.s8 %v321
  %v323 = vlaneseq
  %v324 = vshrl.u32 %v323, 7
  %v325 = vsub.s32 %v322, %v324
  %v326 = vrot.slane %v319, %v325
  %v328 = vadd.f32 %v294, %v326
  %v329 = vlaneseq
  %vm330 = vcmp.ge.s32.totalorder %v329, 0
  %vm331 = vcmp.lt.s32.totalorder %v329, 512
  %vm332 = vmand %vm330, %vm331
  %333 = vst.msk [vmem:[%s2] sm:$0xf] %vm332, %v328
  // Predicated region
  $region6: #{gaussian_noise.1} parent=0 // pred_check
    _
  $region7: #{gaussian_noise.1} parent=0 // pred_check_branch
    %335 = sbr.rel (0) target = $region9
  $region8: #{gaussian_noise.1} parent=0 // pred_region
    _
  $region9: #{gaussian_noise.1} parent=0 // pred_fallthru
    _
  // Predicated region
  $region10: #{gaussian_noise.1} parent=0 // pred_check
    _
  $region11: #{gaussian_noise.1} parent=0 // pred_check_branch
    %337 = sbr.rel (0) target = $region13
  $region12: #{gaussian_noise.1} parent=0 // pred_region
    _
  $region13: #{gaussian_noise.1} parent=0 // pred_fallthru
    _

</llo_original>
